<compile_context>
chip_gen: v5e
topology: v5e:2x2
jax: 0.10.0
libtpu: 0.0.40
codegen_flags: <defaults>
</compile_context>

<pallas_src>
import functools

import jax
import jax.numpy as jnp
from jax.experimental import pallas as pl
from jax.experimental.pallas import tpu as pltpu


def _pinn_kernel(x_ref, w1_ref, b1_ref, w2_ref, b2_ref, w3_ref, b3_ref, o_ref,
                 *, matmul_dtype):
    """One batch tile of the PINN MLP in batch-on-lanes layout.

    Shapes inside the kernel (T = batch tile along the lane axis):
      x_ref  : (in_dim, T)     w1_ref : (H, in_dim)    b1_ref : (H, 1)
      w2_ref : (H, H)          b2_ref : (H, 1)
      w3_ref : (out_dim, H)    b3_ref : (out_dim, 1)
      o_ref  : (out_dim, T)
    """
    x = x_ref[...]                           # (in_dim, T)  f32
    w1 = w1_ref[...]                         # (H, in_dim)  f32
    in_dim = x.shape[0]

    # ---- Layer 1: K = in_dim (=2) is far too small for the MXU, so do it as
    # in_dim VPU broadcast-FMAs: h[h_idx, n] = sum_k w1[h_idx, k] * x[k, n].
    h = w1[:, 0:1] * x[0:1, :]               # (H,1)*(1,T) -> (H,T)
    for k in range(1, in_dim):               # static, fully unrolled (in_dim tiny)
        h = h + w1[:, k:k + 1] * x[k:k + 1, :]
    h1 = jnp.tanh(h + b1_ref[...])           # (H, T), f32 tanh (EUP)

    # ---- Layer 2: the only contraction with real work -> MXU, f32 accumulate.
    h2 = jnp.tanh(
        jnp.dot(w2_ref[...], h1.astype(matmul_dtype),
                preferred_element_type=jnp.float32)
        + b2_ref[...]
    )                                        # (H, T)

    # ---- Layer 3: (out_dim, H) @ (H, T) -> lane-dense (out_dim, T) output.
    y = jnp.dot(w3_ref[...], h2.astype(matmul_dtype),
                preferred_element_type=jnp.float32) + b3_ref[...]
    o_ref[...] = y.astype(o_ref.dtype)


def pinn_forward(x, params, *, tile_n=2048, matmul_dtype=jnp.float32):
    """PINN forward.

    x: (N, in_dim) float32 (PyTorch row-major convention).
    params: PyTorch-convention weights: w* of shape (out_features, in_features),
            b* of shape (out_features,).
    Returns (N, out_dim) float32, identical semantics to
    Linear->Tanh->Linear->Tanh->Linear.
    """
    N, in_dim = x.shape
    H, in_dim_w = params["w1"].shape
    assert in_dim_w == in_dim
    out_dim = params["w3"].shape[0]

    # Lane-align the batch tile and pad the batch so any N works; slice back
    # at the end.  tile is clamped so tiny problems don't over-pad.
    tile = max(128, (int(tile_n) // 128) * 128)
    n_pad = pl.cdiv(N, 128) * 128
    tile = min(tile, n_pad)
    n_pad = pl.cdiv(n_pad, tile) * tile
    grid = (n_pad // tile,)

    # Batch-on-lanes layout: (in_dim, n_pad); padded columns are zeros.
    xt = jnp.pad(x.T, ((0, 0), (0, n_pad - N)))

    # MXU inputs pre-cast once (no per-grid-step cast inside the kernel).
    w1 = params["w1"].astype(jnp.float32)              # VPU layer stays f32
    w2 = params["w2"].astype(matmul_dtype)
    w3 = params["w3"].astype(matmul_dtype)
    b1 = params["b1"].reshape(H, 1).astype(jnp.float32)
    b2 = params["b2"].reshape(H, 1).astype(jnp.float32)
    b3 = params["b3"].reshape(out_dim, 1).astype(jnp.float32)

    def tile_spec(rows):
        # rows on sublanes, batch tile on lanes (lane-dense loads/stores).
        return pl.BlockSpec((rows, tile), lambda i: (0, i))

    def whole(shape):
        # Full-array block, constant index_map: fetched once, never re-DMA'd.
        return pl.BlockSpec(shape, lambda i: tuple(0 for _ in shape))

    out_t = pl.pallas_call(
        functools.partial(_pinn_kernel, matmul_dtype=matmul_dtype),
        out_shape=jax.ShapeDtypeStruct((out_dim, n_pad), jnp.float32),
        grid_spec=pltpu.PrefetchScalarGridSpec(
            num_scalar_prefetch=0,
            grid=grid,
            in_specs=[
                tile_spec(in_dim),     # x tile   (in_dim, tile)
                whole(w1.shape),       # (H, in_dim)
                whole(b1.shape),       # (H, 1)
                whole(w2.shape),       # (H, H)
                whole(b2.shape),       # (H, 1)
                whole(w3.shape),       # (out_dim, H)
                whole(b3.shape),       # (out_dim, 1)
            ],
            out_specs=tile_spec(out_dim),      # (out_dim, tile), lane-dense
        ),
        compiler_params=pltpu.CompilerParams(
            dimension_semantics=("parallel",),   # lets v7x split the grid over 2 TCs
        ),
    )(xt, w1, b1, w2, b2, w3, b3)

    return out_t[:, :N].T                      # back to PyTorch (N, out_dim)


def init_params(key, in_dim=2, hidden=32, out_dim=1):
    """PyTorch nn.Linear-style init: W ~ U(-1/sqrt(fan_in), 1/sqrt(fan_in))."""
    ks = jax.random.split(key, 6)
    s1 = 1.0 / float(jnp.sqrt(in_dim))
    s2 = 1.0 / float(jnp.sqrt(hidden))
    return {
        "w1": jax.random.uniform(ks[0], (hidden, in_dim), jnp.float32, -s1, s1),
        "b1": jax.random.uniform(ks[1], (hidden,), jnp.float32, -s1, s1),
        "w2": jax.random.uniform(ks[2], (hidden, hidden), jnp.float32, -s2, s2),
        "b2": jax.random.uniform(ks[3], (hidden,), jnp.float32, -s2, s2),
        "w3": jax.random.uniform(ks[4], (out_dim, hidden), jnp.float32, -s2, s2),
        "b3": jax.random.uniform(ks[5], (out_dim,), jnp.float32, -s2, s2),
    }


def pinn_reference(x, p):
    """Pure-JAX reference matching the PyTorch module exactly."""
    h1 = jnp.tanh(x @ p["w1"].T + p["b1"])
    h2 = jnp.tanh(h1 @ p["w2"].T + p["b2"])
    return h2 @ p["w3"].T + p["b3"]


if __name__ == "__main__":
    key = jax.random.PRNGKey(0)
    k_x, k_p = jax.random.split(key)

    # Small, deterministic test: N deliberately NOT a multiple of the tile to
    # exercise the padding path; tile_n=128 gives grid=(2,) so the "parallel"
    # axis / pipeline are exercised (production default is tile_n=2048).
    N, IN_DIM, HIDDEN, OUT_DIM = 200, 2, 32, 1
    x = jax.random.normal(k_x, (N, IN_DIM), jnp.float32)
    params = init_params(k_p, IN_DIM, HIDDEN, OUT_DIM)

    out = pinn_forward(x, params, tile_n=128)
    out = jax.block_until_ready(out)

    ref = pinn_reference(x, params)
    assert out.shape == (N, OUT_DIM)
    assert jnp.allclose(out, ref, atol=1e-5, rtol=1e-5)

    print("KERNEL_OK")
</pallas_src>

<mosaic_0001>
module attributes {stable_mosaic.version = 11 : i64} {
  func.func @_pinn_kernel(%arg0: i32, %arg1: memref<2x128xf32, #tpu.memory_space<vmem>>, %arg2: memref<32x2xf32, #tpu.memory_space<vmem>>, %arg3: memref<32x1xf32, #tpu.memory_space<vmem>>, %arg4: memref<32x32xf32, #tpu.memory_space<vmem>>, %arg5: memref<32x1xf32, #tpu.memory_space<vmem>>, %arg6: memref<1x32xf32, #tpu.memory_space<vmem>>, %arg7: memref<1x1xf32, #tpu.memory_space<vmem>>, %arg8: memref<1x128xf32, #tpu.memory_space<vmem>>) attributes {dimension_semantics = [#tpu.dimension_semantics<parallel>], iteration_bounds = array<i64: 2>, scalar_prefetch = 0 : i64, scratch_operands = 0 : i64, tpu.core_type = #tpu.core_type<tc>, window_params = [{transform_indices = @transform_0, window_bounds = array<i64: 2, 128>}, {pipeline_mode = #tpu.pipeline_mode<synchronous>, transform_indices = @transform_1, window_bounds = array<i64: 32, 2>}, {pipeline_mode = #tpu.pipeline_mode<synchronous>, transform_indices = @transform_2, window_bounds = array<i64: 32, 1>}, {pipeline_mode = #tpu.pipeline_mode<synchronous>, transform_indices = @transform_3, window_bounds = array<i64: 32, 32>}, {pipeline_mode = #tpu.pipeline_mode<synchronous>, transform_indices = @transform_4, window_bounds = array<i64: 32, 1>}, {pipeline_mode = #tpu.pipeline_mode<synchronous>, transform_indices = @transform_5, window_bounds = array<i64: 1, 32>}, {pipeline_mode = #tpu.pipeline_mode<synchronous>, transform_indices = @transform_6, window_bounds = array<i64: 1, 1>}, {transform_indices = @transform_7, window_bounds = array<i64: 1, 128>}]} {
    %c0 = arith.constant 0 : index
    %c0_0 = arith.constant 0 : index
    %0 = vector.load %arg1[%c0, %c0_0] : memref<2x128xf32, #tpu.memory_space<vmem>>, vector<2x128xf32>
    %c0_1 = arith.constant 0 : index
    %c0_2 = arith.constant 0 : index
    %1 = vector.load %arg2[%c0_1, %c0_2] : memref<32x2xf32, #tpu.memory_space<vmem>>, vector<32x2xf32>
    %2 = vector.extract_strided_slice %1 {offsets = [0, 0], sizes = [32, 1], strides = [1, 1]} : vector<32x2xf32> to vector<32x1xf32>
    %3 = vector.extract_strided_slice %0 {offsets = [0, 0], sizes = [1, 128], strides = [1, 1]} : vector<2x128xf32> to vector<1x128xf32>
    %4 = vector.broadcast %2 : vector<32x1xf32> to vector<32x128xf32>
    %5 = vector.broadcast %3 : vector<1x128xf32> to vector<32x128xf32>
    %6 = arith.mulf %4, %5 : vector<32x128xf32>
    %7 = vector.extract_strided_slice %1 {offsets = [0, 1], sizes = [32, 1], strides = [1, 1]} : vector<32x2xf32> to vector<32x1xf32>
    %8 = vector.extract_strided_slice %0 {offsets = [1, 0], sizes = [1, 128], strides = [1, 1]} : vector<2x128xf32> to vector<1x128xf32>
    %9 = vector.broadcast %7 : vector<32x1xf32> to vector<32x128xf32>
    %10 = vector.broadcast %8 : vector<1x128xf32> to vector<32x128xf32>
    %11 = arith.mulf %9, %10 : vector<32x128xf32>
    %12 = arith.addf %6, %11 : vector<32x128xf32>
    %c0_3 = arith.constant 0 : index
    %c0_4 = arith.constant 0 : index
    %13 = vector.load %arg3[%c0_3, %c0_4] : memref<32x1xf32, #tpu.memory_space<vmem>>, vector<32x1xf32>
    %14 = vector.broadcast %13 : vector<32x1xf32> to vector<32x128xf32>
    %15 = arith.addf %12, %14 : vector<32x128xf32>
    %16 = math.tanh %15 : vector<32x128xf32>
    %c0_5 = arith.constant 0 : index
    %c0_6 = arith.constant 0 : index
    %17 = vector.load %arg4[%c0_5, %c0_6] : memref<32x32xf32, #tpu.memory_space<vmem>>, vector<32x32xf32>
    %cst = arith.constant dense<0.000000e+00> : vector<32x128xf32>
    %18 = tpu.matmul %17, %16, %cst {dimension_numbers = #tpu.dot_dimension_numbers<[1], [0], [0], [1], [0, 0, 1, 1], [], []>} : vector<32x32xf32>, vector<32x128xf32>, vector<32x128xf32> -> vector<32x128xf32>
    %c0_7 = arith.constant 0 : index
    %c0_8 = arith.constant 0 : index
    %19 = vector.load %arg5[%c0_7, %c0_8] : memref<32x1xf32, #tpu.memory_space<vmem>>, vector<32x1xf32>
    %20 = vector.broadcast %19 : vector<32x1xf32> to vector<32x128xf32>
    %21 = arith.addf %18, %20 : vector<32x128xf32>
    %22 = math.tanh %21 : vector<32x128xf32>
    %c0_9 = arith.constant 0 : index
    %c0_10 = arith.constant 0 : index
    %23 = vector.load %arg6[%c0_9, %c0_10] : memref<1x32xf32, #tpu.memory_space<vmem>>, vector<1x32xf32>
    %cst_11 = arith.constant dense<0.000000e+00> : vector<1x128xf32>
    %24 = tpu.matmul %23, %22, %cst_11 {dimension_numbers = #tpu.dot_dimension_numbers<[1], [0], [0], [1], [0, 0, 1, 1], [], []>} : vector<1x32xf32>, vector<32x128xf32>, vector<1x128xf32> -> vector<1x128xf32>
    %c0_12 = arith.constant 0 : index
    %c0_13 = arith.constant 0 : index
    %25 = vector.load %arg7[%c0_12, %c0_13] : memref<1x1xf32, #tpu.memory_space<vmem>>, vector<1x1xf32>
    %26 = vector.broadcast %25 : vector<1x1xf32> to vector<1x128xf32>
    %27 = arith.addf %24, %26 : vector<1x128xf32>
    %c0_14 = arith.constant 0 : index
    %c0_15 = arith.constant 0 : index
    %28 = vector.load %arg8[%c0_14, %c0_15] : memref<1x128xf32, #tpu.memory_space<vmem>>, vector<1x128xf32>
    tpu.vector_store %arg8[%c0_14, %c0_15], %27 {strides = array<i32>} : memref<1x128xf32, #tpu.memory_space<vmem>>, vector<1x128xf32>,
    return
  }
  func.func @transform_0(%arg0: i32) -> (i32, i32) {
    %c0_i32 = arith.constant 0 : i32
    %c0_i32_0 = arith.constant 0 : i32
    return %c0_i32, %arg0 : i32, i32
  }
  func.func @transform_1(%arg0: i32) -> (i32, i32) {
    %c0_i32 = arith.constant 0 : i32
    %c0_i32_0 = arith.constant 0 : i32
    %c0_i32_1 = arith.constant 0 : i32
    return %c0_i32, %c0_i32_0 : i32, i32
  }
  func.func @transform_2(%arg0: i32) -> (i32, i32) {
    %c0_i32 = arith.constant 0 : i32
    %c0_i32_0 = arith.constant 0 : i32
    %c0_i32_1 = arith.constant 0 : i32
    return %c0_i32, %c0_i32_0 : i32, i32
  }
  func.func @transform_3(%arg0: i32) -> (i32, i32) {
    %c0_i32 = arith.constant 0 : i32
    %c0_i32_0 = arith.constant 0 : i32
    %c0_i32_1 = arith.constant 0 : i32
    return %c0_i32, %c0_i32_0 : i32, i32
  }
  func.func @transform_4(%arg0: i32) -> (i32, i32) {
    %c0_i32 = arith.constant 0 : i32
    %c0_i32_0 = arith.constant 0 : i32
    %c0_i32_1 = arith.constant 0 : i32
    return %c0_i32, %c0_i32_0 : i32, i32
  }
  func.func @transform_5(%arg0: i32) -> (i32, i32) {
    %c0_i32 = arith.constant 0 : i32
    %c0_i32_0 = arith.constant 0 : i32
    %c0_i32_1 = arith.constant 0 : i32
    return %c0_i32, %c0_i32_0 : i32, i32
  }
  func.func @transform_6(%arg0: i32) -> (i32, i32) {
    %c0_i32 = arith.constant 0 : i32
    %c0_i32_0 = arith.constant 0 : i32
    %c0_i32_1 = arith.constant 0 : i32
    return %c0_i32, %c0_i32_0 : i32, i32
  }
  func.func @transform_7(%arg0: i32) -> (i32, i32) {
    %c0_i32 = arith.constant 0 : i32
    %c0_i32_0 = arith.constant 0 : i32
    return %c0_i32, %arg0 : i32, i32
  }
}

</mosaic_0001>

<llo_original>
// kernel: tpu_custom_call.1
$region0: #{tpu_custom_call.1}
  #allocation0 [shape = 'u32[]', space=smem, size = 0x4, offset = 0x4, fixed_abs, tag = 'smem constant byte address 0x4 - core index']
  #allocation1 [shape = 'u32[72,128]{1,0:T(1,128)}', space=vmem, size = 0x9000, scoped, tag = 'internal scratch']
  #allocation2 [shape = 'f32[1,1]{1,0:T(1,128)S(1)}', space=vmem, size = 0x200, scoped, tag = 'scoped memory for tpu_custom_call.1']
  %s0 = inlined_call_operand.vmem [shape: f32[2,256], index: 0, kind: input, shape index: {}]
  %s1 = inlined_call_operand.vmem [shape: f32[32,2], index: 1, kind: input, shape index: {}]
  %s2 = inlined_call_operand.vmem [shape: f32[32,1], index: 2, kind: input, shape index: {}]
  %s3 = inlined_call_operand.vmem [shape: f32[32,32], index: 3, kind: input, shape index: {}]
  %s4 = inlined_call_operand.vmem [shape: f32[32,1], index: 4, kind: input, shape index: {}]
  %s5 = inlined_call_operand.vmem [shape: f32[1,32], index: 5, kind: input, shape index: {}]
  %s6 = inlined_call_operand.<no memory space> [shape: f32[1,1], index: 6, kind: input, shape index: {}]
  %s7 = inlined_call_operand.hbm [shape: f32[1,256], index: 7, kind: output, shape index: {}]
  %s8 = sld [smem:[#allocation0]]
  $region61: #{tpu_custom_call.1} parent=0
    _
  %s10 = ssub.s32 1, %s8
  %s11 = scalar_select 0, %s10, %s8
  %v12 = vstv %s6
  %13 = vst [vmem:[#allocation2] sm:$0x1] %v12
  $region1: #{tpu_custom_call.1} parent=0
    #allocation3 [shape = 'u8[1024]{0}', space=vmem, size = 0x400, scoped, tag = 'output window, operand 0']
    #allocation4 [shape = 's32[2]{0}', space=sflag, size = 0x8, scoped, tag = 'scoped memory for tpu_custom_call.1']
    %14 = vsyncpa [#allocation4], 0
    %s15 = scalar_lea.sflag [#allocation4], 1
    %16 = vsyncpa %s15, 0
    loop: start=0, step=1, limit=4
    $region2: #{tpu_custom_call.1} parent=1 // loop_pre_header
      _
    $region3: #{tpu_custom_call.1} parent=1 // loop_header
      %s18 = sphi 0, %s22
      %p19 = scmp.ge.s32.totalorder %s18, 4
      %s28 = sphi 0, %s30
      %s31 = sphi 0, %s28
      %s32 = sphi 0, %s31
      %s48 = sphi 0, %s32
      %s52 = sphi 0, %s52
      %s54 = sphi 0, %s52
      %s55 = sphi 0, %s54
      %s69 = sphi 0, %s55
      %s73 = sphi 0, %s73
      %s75 = sphi 0, %s73
      %s76 = sphi 0, %s75
      %s90 = sphi 0, %s76
      %s94 = sphi 0, %s94
      %s96 = sphi 0, %s94
      %s97 = sphi 0, %s96
      %s111 = sphi 0, %s97
      %s115 = sphi 0, %s115
      %s117 = sphi 0, %s115
      %s118 = sphi 0, %s117
      %s132 = sphi 0, %s118
      %s136 = sphi 0, %s136
      %s138 = sphi 0, %s136
      %s139 = sphi 0, %s138
      %s153 = sphi 0, %s139
      %s157 = sphi 0, %s157
      %s159 = sphi 0, %s157
      %s160 = sphi 0, %s159
      %s174 = sphi 0, %s160
      %s180 = sphi 0, %s182
      %s183 = sphi 0, %s180
      %s184 = sphi 0, %s183
      %s200 = sphi 0, %s184
    $region4: #{tpu_custom_call.1} parent=1 // loop_header_branch
      %21 = sbr.rel (%p19) target = $region8
    $region5: #{tpu_custom_call.1} parent=1 // loop_body
      %s23 = ssub.s32 %s18, 1
      %s24 = ssub.s32 %s18, 2
      %s25 = sadd.s32 %s18, 1
      %s26 = ssub.s32 %s18, %s25
      %p27 = scmp.eq.s32.totalorder %s26, 0
      %s29 = sadd.s32 %s28, 1
      %s30 = scalar_select %p27, %s28, %s29
      %p33 = pneg %p27
      %p34 = scmp.eq.s32.totalorder %s18, 1
      %p35 = por %p33, %p34
      %p36 = scmp.ne.s32.totalorder %s28, %s31
      %p37 = scmp.eq.s32.totalorder %s18, 0
      %p38 = por %p36, %p37
      %p39 = scmp.ne.s32.totalorder %s28, %s31
      %p40 = scmp.eq.s32.totalorder %s23, 1
      %p41 = por %p39, %p40
      %p42 = scmp.ne.s32.totalorder %s31, %s32
      %p43 = scmp.eq.s32.totalorder %s23, 0
      %p44 = por %p42, %p43
      %p45 = scmp.ne.s32.totalorder %s31, %s32
      %p46 = scmp.eq.s32.totalorder %s24, 1
      %p47 = por %p45, %p46
      %p49 = scmp.ne.s32.totalorder %s32, %s48
      %p50 = scmp.eq.s32.totalorder %s24, 0
      %p51 = por %p49, %p50
      %s53 = sadd.s32 %s52, 1
      %p56 = scmp.eq.s32.totalorder %s18, 1
      %p57 = scmp.ne.s32.totalorder %s52, %s54
      %p58 = scmp.eq.s32.totalorder %s18, 0
      %p59 = por %p57, %p58
      %p60 = scmp.ne.s32.totalorder %s52, %s54
      %p61 = scmp.eq.s32.totalorder %s23, 1
      %p62 = por %p60, %p61
      %p63 = scmp.ne.s32.totalorder %s54, %s55
      %p64 = scmp.eq.s32.totalorder %s23, 0
      %p65 = por %p63, %p64
      %p66 = scmp.ne.s32.totalorder %s54, %s55
      %p67 = scmp.eq.s32.totalorder %s24, 1
      %p68 = por %p66, %p67
      %p70 = scmp.ne.s32.totalorder %s55, %s69
      %p71 = scmp.eq.s32.totalorder %s24, 0
      %p72 = por %p70, %p71
      %s74 = sadd.s32 %s73, 1
      %p77 = scmp.eq.s32.totalorder %s18, 1
      %p78 = scmp.ne.s32.totalorder %s73, %s75
      %p79 = scmp.eq.s32.totalorder %s18, 0
      %p80 = por %p78, %p79
      %p81 = scmp.ne.s32.totalorder %s73, %s75
      %p82 = scmp.eq.s32.totalorder %s23, 1
      %p83 = por %p81, %p82
      %p84 = scmp.ne.s32.totalorder %s75, %s76
      %p85 = scmp.eq.s32.totalorder %s23, 0
      %p86 = por %p84, %p85
      %p87 = scmp.ne.s32.totalorder %s75, %s76
      %p88 = scmp.eq.s32.totalorder %s24, 1
      %p89 = por %p87, %p88
      %p91 = scmp.ne.s32.totalorder %s76, %s90
      %p92 = scmp.eq.s32.totalorder %s24, 0
      %p93 = por %p91, %p92
      %s95 = sadd.s32 %s94, 1
      %p98 = scmp.eq.s32.totalorder %s18, 1
      %p99 = scmp.ne.s32.totalorder %s94, %s96
      %p100 = scmp.eq.s32.totalorder %s18, 0
      %p101 = por %p99, %p100
      %p102 = scmp.ne.s32.totalorder %s94, %s96
      %p103 = scmp.eq.s32.totalorder %s23, 1
      %p104 = por %p102, %p103
      %p105 = scmp.ne.s32.totalorder %s96, %s97
      %p106 = scmp.eq.s32.totalorder %s23, 0
      %p107 = por %p105, %p106
      %p108 = scmp.ne.s32.totalorder %s96, %s97
      %p109 = scmp.eq.s32.totalorder %s24, 1
      %p110 = por %p108, %p109
      %p112 = scmp.ne.s32.totalorder %s97, %s111
      %p113 = scmp.eq.s32.totalorder %s24, 0
      %p114 = por %p112, %p113
      %s116 = sadd.s32 %s115, 1
      %p119 = scmp.eq.s32.totalorder %s18, 1
      %p120 = scmp.ne.s32.totalorder %s115, %s117
      %p121 = scmp.eq.s32.totalorder %s18, 0
      %p122 = por %p120, %p121
      %p123 = scmp.ne.s32.totalorder %s115, %s117
      %p124 = scmp.eq.s32.totalorder %s23, 1
      %p125 = por %p123, %p124
      %p126 = scmp.ne.s32.totalorder %s117, %s118
      %p127 = scmp.eq.s32.totalorder %s23, 0
      %p128 = por %p126, %p127
      %p129 = scmp.ne.s32.totalorder %s117, %s118
      %p130 = scmp.eq.s32.totalorder %s24, 1
      %p131 = por %p129, %p130
      %p133 = scmp.ne.s32.totalorder %s118, %s132
      %p134 = scmp.eq.s32.totalorder %s24, 0
      %p135 = por %p133, %p134
      %s137 = sadd.s32 %s136, 1
      %p140 = scmp.eq.s32.totalorder %s18, 1
      %p141 = scmp.ne.s32.totalorder %s136, %s138
      %p142 = scmp.eq.s32.totalorder %s18, 0
      %p143 = por %p141, %p142
      %p144 = scmp.ne.s32.totalorder %s136, %s138
      %p145 = scmp.eq.s32.totalorder %s23, 1
      %p146 = por %p144, %p145
      %p147 = scmp.ne.s32.totalorder %s138, %s139
      %p148 = scmp.eq.s32.totalorder %s23, 0
      %p149 = por %p147, %p148
      %p150 = scmp.ne.s32.totalorder %s138, %s139
      %p151 = scmp.eq.s32.totalorder %s24, 1
      %p152 = por %p150, %p151
      %p154 = scmp.ne.s32.totalorder %s139, %s153
      %p155 = scmp.eq.s32.totalorder %s24, 0
      %p156 = por %p154, %p155
      %s158 = sadd.s32 %s157, 1
      %p161 = scmp.eq.s32.totalorder %s18, 1
      %p162 = scmp.ne.s32.totalorder %s157, %s159
      %p163 = scmp.eq.s32.totalorder %s18, 0
      %p164 = por %p162, %p163
      %p165 = scmp.ne.s32.totalorder %s157, %s159
      %p166 = scmp.eq.s32.totalorder %s23, 1
      %p167 = por %p165, %p166
      %p168 = scmp.ne.s32.totalorder %s159, %s160
      %p169 = scmp.eq.s32.totalorder %s23, 0
      %p170 = por %p168, %p169
      %p171 = scmp.ne.s32.totalorder %s159, %s160
      %p172 = scmp.eq.s32.totalorder %s24, 1
      %p173 = por %p171, %p172
      %p175 = scmp.ne.s32.totalorder %s160, %s174
      %p176 = scmp.eq.s32.totalorder %s24, 0
      %p177 = por %p175, %p176
      %s178 = ssub.s32 %s18, %s25
      %p179 = scmp.eq.s32.totalorder %s178, 0
      %s181 = sadd.s32 %s180, 1
      %s182 = scalar_select %p179, %s180, %s181
      %p185 = pneg %p179
      %p186 = scmp.eq.s32.totalorder %s18, 1
      %p187 = por %p185, %p186
      %p188 = scmp.ne.s32.totalorder %s180, %s183
      %p189 = scmp.eq.s32.totalorder %s18, 0
      %p190 = por %p188, %p189
      %p191 = scmp.ne.s32.totalorder %s180, %s183
      %p192 = scmp.eq.s32.totalorder %s23, 1
      %p193 = por %p191, %p192
      %p194 = scmp.ne.s32.totalorder %s183, %s184
      %p195 = scmp.eq.s32.totalorder %s23, 0
      %p196 = por %p194, %p195
      %p197 = scmp.ne.s32.totalorder %s183, %s184
      %p198 = scmp.eq.s32.totalorder %s24, 1
      %p199 = por %p197, %p198
      %p201 = scmp.ne.s32.totalorder %s184, %s200
      %p202 = scmp.eq.s32.totalorder %s24, 0
      %p203 = por %p201, %p202
      %p204 = scmp.le.s32.totalorder 1, %s18
      %p205 = scmp.lt.s32.totalorder %s18, 3
      %p206 = pnand %p204, %p205
      %p207 = pneg %p206
      // Predicated region
      $region9: #{tpu_custom_call.1} parent=5 // pred_check
        _
      $region10: #{tpu_custom_call.1} parent=5 // pred_check_branch
        %209 = sbr.rel (%p206) target = $region12
      $region11: #{tpu_custom_call.1} parent=5 // pred_region
        %s210 = ssub.s32 %s18, 1
        // Predicated region
        $region13: #{tpu_custom_call.1} parent=11 // pred_check
          %p211 = pneg %p65
        $region14: #{tpu_custom_call.1} parent=11 // pred_check_branch
          %213 = sbr.rel (%p211) target = $region16
        $region15: #{tpu_custom_call.1} parent=11 // pred_region
          _
        $region16: #{tpu_custom_call.1} parent=11 // pred_fallthru
          _
        // Predicated region
        $region17: #{tpu_custom_call.1} parent=11 // pred_check
          %p214 = pneg %p86
        $region18: #{tpu_custom_call.1} parent=11 // pred_check_branch
          %216 = sbr.rel (%p214) target = $region20
        $region19: #{tpu_custom_call.1} parent=11 // pred_region
          _
        $region20: #{tpu_custom_call.1} parent=11 // pred_fallthru
          _
        // Predicated region
        $region21: #{tpu_custom_call.1} parent=11 // pred_check
          %p217 = pneg %p107
        $region22: #{tpu_custom_call.1} parent=11 // pred_check_branch
          %219 = sbr.rel (%p217) target = $region24
        $region23: #{tpu_custom_call.1} parent=11 // pred_region
          _
        $region24: #{tpu_custom_call.1} parent=11 // pred_fallthru
          _
        // Predicated region
        $region25: #{tpu_custom_call.1} parent=11 // pred_check
          %p220 = pneg %p128
        $region26: #{tpu_custom_call.1} parent=11 // pred_check_branch
          %222 = sbr.rel (%p220) target = $region28
        $region27: #{tpu_custom_call.1} parent=11 // pred_region
          _
        $region28: #{tpu_custom_call.1} parent=11 // pred_fallthru
          _
        // Predicated region
        $region29: #{tpu_custom_call.1} parent=11 // pred_check
          %p223 = pneg %p149
        $region30: #{tpu_custom_call.1} parent=11 // pred_check_branch
          %225 = sbr.rel (%p223) target = $region32
        $region31: #{tpu_custom_call.1} parent=11 // pred_region
          _
        $region32: #{tpu_custom_call.1} parent=11 // pred_fallthru
          _
        // Predicated region
        $region33: #{tpu_custom_call.1} parent=11 // pred_check
          %p226 = pneg %p170
        $region34: #{tpu_custom_call.1} parent=11 // pred_check_branch
          %228 = sbr.rel (%p226) target = $region36
        $region35: #{tpu_custom_call.1} parent=11 // pred_region
          _
        $region36: #{tpu_custom_call.1} parent=11 // pred_fallthru
          _
      $region12: #{tpu_custom_call.1} parent=5 // pred_fallthru
        _
      %p229 = scmp.lt.s32.totalorder %s18, 2
      // Predicated region
      $region37: #{tpu_custom_call.1} parent=5 // pred_check
        %p230 = pneg %p229
      $region38: #{tpu_custom_call.1} parent=5 // pred_check_branch
        %232 = sbr.rel (%p230) target = $region40
      $region39: #{tpu_custom_call.1} parent=5 // pred_region
        // Predicated region
        $region41: #{tpu_custom_call.1} parent=39 // pred_check
          %p233 = pneg %p38
        $region42: #{tpu_custom_call.1} parent=39 // pred_check_branch
          %235 = sbr.rel (%p233) target = $region44
        $region43: #{tpu_custom_call.1} parent=39 // pred_region
          %p236 = scmp.lt.s32.totalorder %s18, 1
          %s237 = scalar_select %p236, %s18, 1
          %s238 = smul.addr %s237, 2
          %s239 = scalar_lea.vmem %s0, %s238
        $region44: #{tpu_custom_call.1} parent=39 // pred_fallthru
          _
      $region40: #{tpu_custom_call.1} parent=5 // pred_fallthru
        _
      %p240 = scmp.le.s32.totalorder 1, %s18
      %p241 = scmp.lt.s32.totalorder %s18, 3
      %p242 = pnand %p240, %p241
      %p243 = pneg %p242
      // Predicated region
      $region45: #{tpu_custom_call.1} parent=5 // pred_check
        _
      $region46: #{tpu_custom_call.1} parent=5 // pred_check_branch
        %245 = sbr.rel (%p242) target = $region48
      $region47: #{tpu_custom_call.1} parent=5 // pred_region
        %s246 = ssub.s32 %s18, 1
        %p247 = scmp.lt.s32.totalorder %s23, 1
        %s248 = scalar_select %p247, %s23, 1
        %s249 = smul.addr %s248, 2
        %s250 = scalar_lea.vmem %s0, %s249
        %p251 = pneg %p44
        %p252 = pneg %p41
        %p253 = pneg %p65
        %p254 = pneg %p62
        %p255 = pneg %p86
        %p256 = pneg %p83
        %p257 = pneg %p107
        %p258 = pneg %p104
        %p259 = pneg %p128
        %p260 = pneg %p125
        %p261 = pneg %p149
        %p262 = pneg %p146
        %p263 = pneg %p170
        %p264 = pneg %p167
        %p265 = pneg %p196
        %p266 = pneg %p193
        %s267 = sand.u32 %s183, 1
        %s268 = scalar_lea.sflag [#allocation4], %s267
        %s269 = sand.u32 %s183, 1
        %s270 = scalar_lea.vmem [#allocation3], %s269
        %p271 = scmp.lt.s32.totalorder %s23, 1
        %s272 = scalar_select %p271, %s23, 1
        %s273 = smul.addr %s272, 2
        %s274 = scalar_lea.vmem %s0, %s273
        %v275 = vld [vmem:[%s274] sm:$0x3]
        %v276 = vld [vmem:[%s1] sm:$0xff]
        %v277 = vld [vmem:[%s1 + $0x8] sm:$0xff]
        %v278 = vld [vmem:[%s1 + $0x10] sm:$0xff]
        %v279 = vld [vmem:[%s1 + $0x18] sm:$0xff]
        %281 = vset.pattern.permute.xlu0 0
        %282 = vperm.xlu0 %281, %v276
        %v283 = vpop.permute.xlu0 %282
        %286 = vset.pattern.permute.xlu0 0
        %287 = vperm.xlu0 %286, %v277
        %v288 = vpop.permute.xlu0 %287
        %291 = vset.pattern.permute.xlu0 0
        %292 = vperm.xlu0 %291, %v278
        %v293 = vpop.permute.xlu0 %292
        %296 = vset.pattern.permute.xlu0 0
        %297 = vperm.xlu0 %296, %v279
        %v298 = vpop.permute.xlu0 %297
        %v300 = vperm.slane %v275, 0
        %v301 = vmul.f32 %v283, %v300
        %v302 = vmul.f32 %v288, %v300
        %v303 = vmul.f32 %v293, %v300
        %v304 = vmul.f32 %v298, %v300
        %305 = vset.pattern.permute.xlu0 1
        %306 = vperm.xlu0 %305, %v276
        %v307 = vpop.permute.xlu0 %306
        %309 = vset.pattern.permute.xlu0 1
        %310 = vperm.xlu0 %309, %v277
        %v311 = vpop.permute.xlu0 %310
        %313 = vset.pattern.permute.xlu0 1
        %314 = vperm.xlu0 %313, %v278
        %v315 = vpop.permute.xlu0 %314
        %317 = vset.pattern.permute.xlu0 1
        %318 = vperm.xlu0 %317, %v279
        %v319 = vpop.permute.xlu0 %318
        %v321 = vperm.slane %v275, 1
        %v322 = vmul.f32 %v307, %v321
        %v323 = vmul.f32 %v311, %v321
        %v324 = vmul.f32 %v315, %v321
        %v325 = vmul.f32 %v319, %v321
        %v326 = vadd.f32 %v301, %v322
        %v327 = vadd.f32 %v302, %v323
        %v328 = vadd.f32 %v303, %v324
        %v329 = vadd.f32 %v304, %v325
        %v330 = vld [vmem:[%s2] sm:$0xff]
        %v331 = vld [vmem:[%s2 + $0x8] sm:$0xff]
        %v332 = vld [vmem:[%s2 + $0x10] sm:$0xff]
        %v333 = vld [vmem:[%s2 + $0x18] sm:$0xff]
        %335 = vset.pattern.permute.xlu0 0
        %336 = vperm.xlu0 %335, %v330
        %v337 = vpop.permute.xlu0 %336
        %340 = vset.pattern.permute.xlu0 0
        %341 = vperm.xlu0 %340, %v331
        %v342 = vpop.permute.xlu0 %341
        %345 = vset.pattern.permute.xlu0 0
        %346 = vperm.xlu0 %345, %v332
        %v347 = vpop.permute.xlu0 %346
        %350 = vset.pattern.permute.xlu0 0
        %351 = vperm.xlu0 %350, %v333
        %v352 = vpop.permute.xlu0 %351
        %v354 = vadd.f32 %v326, %v337
        %v355 = vadd.f32 %v327, %v342
        %v356 = vadd.f32 %v328, %v347
        %v357 = vadd.f32 %v329, %v352
        %v358 = vtanh.pop %v354
        %v359 = vtanh.pop %v355
        %v360 = vtanh.pop %v356
        %v361 = vtanh.pop %v357
        %v362 = vld [vmem:[%s3] sm:$0xff]
        %v363 = vld [vmem:[%s3 + $0x8] sm:$0xff]
        %v364 = vld [vmem:[%s3 + $0x10] sm:$0xff]
        %v365 = vld [vmem:[%s3 + $0x18] sm:$0xff]
        %v366 = vld [vmem:[%s4] sm:$0xff]
        %v367 = vld [vmem:[%s4 + $0x8] sm:$0xff]
        %v368 = vld [vmem:[%s4 + $0x10] sm:$0xff]
        %v369 = vld [vmem:[%s4 + $0x18] sm:$0xff]
        %371 = vset.pattern.permute.xlu0 0
        %372 = vperm.xlu0 %371, %v366
        %v373 = vpop.permute.xlu0 %372
        %376 = vset.pattern.permute.xlu0 0
        %377 = vperm.xlu0 %376, %v367
        %v378 = vpop.permute.xlu0 %377
        %381 = vset.pattern.permute.xlu0 0
        %382 = vperm.xlu0 %381, %v368
        %v383 = vpop.permute.xlu0 %382
        %386 = vset.pattern.permute.xlu0 0
        %387 = vperm.xlu0 %386, %v369
        %v388 = vpop.permute.xlu0 %387
        %vm390 = vcmask 261120
        %v392 = vsel %vm390, %v362, 0
        %v395 = vsel %vm390, %v363, 0
        %v398 = vsel %vm390, %v364, 0
        %v401 = vsel %vm390, %v365, 0
        %403 = vmatpush.msra.mxu0 0.0
        %404 = vmatpush.msra.mxu0 0.0
        %405 = vmatpush.msra.mxu0 0.0
        %406 = vmatpush.msra.mxu0 0.0
        %407 = vmatpush.msra.mxu0 0.0
        %408 = vmatpush.msra.mxu0 0.0
        %409 = vmatpush.msra.mxu0 0.0
        %410 = vmatpush.msra.mxu0 0.0
        %411 = vmatpush.msra.mxu0 0.0
        %412 = vmatpush.msra.mxu0 0.0
        %413 = vmatpush.msra.mxu0 0.0
        %414 = vmatpush.msra.mxu0 0.0
        %415 = vmatpush.msra.mxu0 %v361
        %416 = vmatpush.msra.mxu0 %v360
        %417 = vmatpush.msra.mxu0 %v359
        %418 = vmatpush.msra.mxu0 %v358
        %419 = vmatmul.f32.gmra.mxu0 %v392
        %v420 = vpop.f32.mrf.mxu0
        %v421 = vadd.f32 %v373, %v420
        %422 = vmatmul.f32.gmra.mxu0 %v395
        %v423 = vpop.f32.mrf.mxu0
        %v424 = vadd.f32 %v378, %v423
        %425 = vmatmul.f32.gmra.mxu0 %v398
        %v426 = vpop.f32.mrf.mxu0
        %v427 = vadd.f32 %v383, %v426
        %428 = vmatmul.f32.gmra.mxu0 %v401
        %v429 = vpop.f32.mrf.mxu0
        %v430 = vadd.f32 %v388, %v429
        %431 = vdwg.mxu0
        %v432 = vtanh.pop %v421
        %v433 = vtanh.pop %v424
        %v434 = vtanh.pop %v427
        %v435 = vtanh.pop %v430
        %v436 = vld [vmem:[%s5] sm:$0x1]
        %v437 = vld [vmem:[#allocation2] sm:$0x1]
        %439 = vset.pattern.permute.xlu0 0
        %440 = vperm.xlu0 %439, %v437
        %v441 = vpop.permute.xlu0 %440
        %v443 = vperm.slane %v441, 0
        %v445 = vsel %vm390, %v436, 0
        %447 = vmatpush.msra.mxu0 0.0
        %448 = vmatpush.msra.mxu0 0.0
        %449 = vmatpush.msra.mxu0 0.0
        %450 = vmatpush.msra.mxu0 0.0
        %451 = vmatpush.msra.mxu0 0.0
        %452 = vmatpush.msra.mxu0 0.0
        %453 = vmatpush.msra.mxu0 0.0
        %454 = vmatpush.msra.mxu0 0.0
        %455 = vmatpush.msra.mxu0 0.0
        %456 = vmatpush.msra.mxu0 0.0
        %457 = vmatpush.msra.mxu0 0.0
        %458 = vmatpush.msra.mxu0 0.0
        %459 = vmatpush.msra.mxu0 %v435
        %460 = vmatpush.msra.mxu0 %v434
        %461 = vmatpush.msra.mxu0 %v433
        %462 = vmatpush.msra.mxu0 %v432
        %463 = vmatmul.f32.gmra.mxu0 %v445
        %v464 = vpop.f32.mrf.mxu0
        %v465 = vadd.f32 %v443, %v464
        %466 = vdwg.mxu0
        %467 = vst [vmem:[%s270] sm:$0x1] %v465
        %s468 = sand.u32 %s183, 1
        %s469 = scalar_lea.sflag [#allocation4], %s468
        %s470 = sand.u32 %s183, 1
        %s471 = scalar_lea.vmem [#allocation3], %s470
        // Predicated region
        $region49: #{tpu_custom_call.1} parent=47 // pred_check
          %p472 = pneg %p193
        $region50: #{tpu_custom_call.1} parent=47 // pred_check_branch
          %474 = sbr.rel (%p472) target = $region52
        $region51: #{tpu_custom_call.1} parent=47 // pred_region
          %476 = vsyncadd %s469, 0
          %s477 = scalar_lea.hbm %s7, %s23
          %s479 = sshll.u32 %s471, 4
          %s480 = int_to_ptr.vmem [resolvable:$true] %s479
          %s481 = sshll.u32 %s477, 4
          %s482 = int_to_ptr.hbm [resolvable:$true] %s481
          %484 = dma.vmem_to_hbm [thread:$0]  %s480, 16, %s482, %s469
        $region52: #{tpu_custom_call.1} parent=47 // pred_fallthru
          _
      $region48: #{tpu_custom_call.1} parent=5 // pred_fallthru
        _
      %p485 = scmp.le.s32.totalorder 2, %s18
      // Predicated region
      $region53: #{tpu_custom_call.1} parent=5 // pred_check
        %p486 = pneg %p485
      $region54: #{tpu_custom_call.1} parent=5 // pred_check_branch
        %488 = sbr.rel (%p486) target = $region56
      $region55: #{tpu_custom_call.1} parent=5 // pred_region
        %s489 = ssub.s32 %s18, 2
        // Predicated region
        $region57: #{tpu_custom_call.1} parent=55 // pred_check
          %p490 = pneg %p199
        $region58: #{tpu_custom_call.1} parent=55 // pred_check_branch
          %492 = sbr.rel (%p490) target = $region60
        $region59: #{tpu_custom_call.1} parent=55 // pred_region
          %s493 = sand.u32 %s184, 1
          %s494 = scalar_lea.sflag [#allocation4], %s493
          %s495 = sand.u32 %s184, 1
          %s496 = scalar_lea.vmem [#allocation3], %s495
          %498 = dma.done %s494, 16
        $region60: #{tpu_custom_call.1} parent=55 // pred_fallthru
          _
      $region56: #{tpu_custom_call.1} parent=5 // pred_fallthru
        _
    $region6: #{tpu_custom_call.1} parent=1 // loop_footer
      %s22 = sadd.s32 1, %s18
    $region7: #{tpu_custom_call.1} parent=1 // loop_footer_branch
      %17 = sbr.rel target = $region3
    $region8: #{tpu_custom_call.1} parent=1 // loop_exit
      _
    %499 = vsyncpa [#allocation4], 1
    %s500 = scalar_lea.sflag [#allocation4], 1
    %501 = vsyncpa %s500, 1

</llo_original>
